<compile_context>
chip_gen: v6e
topology: v6e:2x2x1
jax: 0.10.0
libtpu: 0.0.40
codegen_flags: <defaults>
</compile_context>

<pallas_src>
import jax
import jax.numpy as jnp
from jax.experimental import pallas as pl
from jax.experimental.pallas import tpu as pltpu


def _round_up(x, m):
    return ((x + m - 1) // m) * m


_TM_MAX = 128  # row tile: MXU-sized on v5e; keeps >=2 row tiles for megacore.


def _vmem_budget_bytes():
    """Generation-aware VMEM budget: ~44 MiB on v7x (64 MiB physical),
    ~96 MiB on v5e / v6e (128 MiB physical)."""
    cap = 64 * 1024 * 1024
    try:
        info = pltpu.get_tpu_info()
        cap = int(getattr(info, "vmem_capacity_bytes", cap))
    except Exception:
        pass
    if cap <= 80 * 1024 * 1024:
        return 44 * 1024 * 1024
    return 96 * 1024 * 1024


def _vmem_use(tm, tk, h_pad, e_pad, n_buf):
    """Estimated VMEM bytes, counting pipeline double-buffering of the
    constant-index ("resident") specs and the fp32 epilogue temporaries."""
    return (n_buf * tm * tk * 2                # x tiles (bf16)
            + n_buf * tk * h_pad * 2           # W1 K-slabs (bf16)
            + 2 * h_pad * e_pad * 2            # W2 (bf16, still double-buffered)
            + 2 * (h_pad + e_pad) * 4          # b1 / b2 (fp32, double-buffered)
            + 2 * tm * e_pad * 4               # fp32 output, double-buffered
            + tm * h_pad * 4                   # fp32 accumulator scratch
            + tm * h_pad * 6 + tm * e_pad * 4)  # epilogue temps: h (f32+bf16), e (f32)


def _plan(d, hidden, embed, budget):
    """Pick padded dims and the K slab size tk from the VMEM budget."""
    h_pad = _round_up(hidden, 128)
    e_pad = _round_up(embed, 128)      # lane-dense output (unmasked vst)
    d_pad = _round_up(d, 128)
    tm = _TM_MAX
    fixed = _vmem_use(tm, 0, h_pad, e_pad, 2)
    per_tk = 2 * (tm + h_pad) * 2      # bf16 x tile + W1 slab, double-buffered
    avail = budget - fixed
    if avail < per_tk * 128:
        # TODO(synk): very large `hidden` would additionally need a hidden tile;
        # fall back to the smallest K slab and rely on vmem_limit_bytes=budget.
        tk = 128
    else:
        tk = min(((avail // per_tk) // 128) * 128, 4096)
    if tk >= d_pad:
        tk = d_pad                     # single K step, W1 fully resident
    else:
        d_pad = _round_up(d_pad, tk)
    return d_pad, tk, h_pad, e_pad


# ---------------------------------------------------------------------------
# Kernel body.  Grid = (row_tiles, k_tiles); K (reduction over D) is last.
# ---------------------------------------------------------------------------
def _embed_kernel(x_ref, w1_ref, b1_ref, w2_ref, b2_ref, out_ref, acc_ref):
    k = pl.program_id(1)

    @pl.when(k == 0)
    def _():
        acc_ref[...] = jnp.zeros_like(acc_ref)

    # First matmul: bf16 x bf16 -> fp32 accumulation on the MXU.
    acc_ref[...] += jnp.dot(
        x_ref[...], w1_ref[...], preferred_element_type=jnp.float32
    )

    @pl.when(k == pl.num_programs(1) - 1)
    def _():
        h = jnp.maximum(acc_ref[...] + b1_ref[...], 0.0)      # fp32 bias + ReLU
        e = jnp.dot(
            h.astype(w2_ref.dtype), w2_ref[...],
            preferred_element_type=jnp.float32,
        ) + b2_ref[...]
        out_ref[...] = e.astype(out_ref.dtype)


# ---------------------------------------------------------------------------
# Factory: pad/cast the shared embedding-net weights ONCE and close over the
# static tiling plan (mirrors constructing DeepSortTriplet(embedding_net)).
# ---------------------------------------------------------------------------
def make_deep_sort_triplet(params):
    w1, b1, w2, b2 = params
    d, hidden = int(w1.shape[0]), int(w1.shape[1])
    embed = int(w2.shape[1])
    budget = _vmem_budget_bytes()
    d_pad, tk, h_pad, e_pad = _plan(d, hidden, embed, budget)

    # One-time weight padding + bf16 cast (zero padding preserves the math).
    w1p = jnp.zeros((d_pad, h_pad), jnp.bfloat16).at[:d, :hidden].set(
        jnp.asarray(w1).astype(jnp.bfloat16))
    b1p = jnp.zeros((1, h_pad), jnp.float32).at[:, :hidden].set(
        jnp.asarray(b1).reshape(1, -1).astype(jnp.float32))
    w2p = jnp.zeros((h_pad, e_pad), jnp.bfloat16).at[:hidden, :embed].set(
        jnp.asarray(w2).astype(jnp.bfloat16))
    b2p = jnp.zeros((1, e_pad), jnp.float32).at[:, :embed].set(
        jnp.asarray(b2).reshape(1, -1).astype(jnp.float32))

    def _pick_tm(rows):
        if rows >= 2 * _TM_MAX:
            return _TM_MAX
        if rows >= 32:
            # split into >= 2 row tiles (v7x megacore), 16-row granularity
            # (bf16 packs 16 rows per vreg), limited zero-row padding.
            return _round_up((rows + 1) // 2, 16)
        return _round_up(max(rows, 1), 16)

    def _embedding_net(x_flat):
        rows, d_in = x_flat.shape
        tm = _pick_tm(rows)
        rows_pad = _round_up(rows, tm)
        num_m = rows_pad // tm
        num_k = d_pad // tk

        x_bf16 = x_flat.astype(jnp.bfloat16)
        if rows_pad == rows and d_pad == d_in:
            xp = x_bf16                              # no extra HBM pad copy
        else:
            xp = jnp.pad(x_bf16, ((0, rows_pad - rows), (0, d_pad - d_in)))

        # Deeper pipelining on the streamed operands when K-tiled and VMEM
        # allows (hides DMA latency, mainly helps low-BW v5e).
        if num_k >= 3 and _vmem_use(tm, tk, h_pad, e_pad, 3) <= budget:
            x_spec = pl.BlockSpec((tm, tk), lambda i, k: (i, k),
                                  pipeline_mode=pl.Buffered(3))
            w1_spec = pl.BlockSpec((tk, h_pad), lambda i, k: (k, 0),
                                   pipeline_mode=pl.Buffered(3))
        else:
            x_spec = pl.BlockSpec((tm, tk), lambda i, k: (i, k))
            w1_spec = pl.BlockSpec((tk, h_pad), lambda i, k: (k, 0))

        return pl.pallas_call(
            _embed_kernel,
            out_shape=jax.ShapeDtypeStruct((rows_pad, e_pad), jnp.float32),
            grid_spec=pltpu.PrefetchScalarGridSpec(
                num_scalar_prefetch=0,
                grid=(num_m, num_k),
                in_specs=[
                    x_spec,                                          # x tile
                    w1_spec,                                         # W1 K-slab
                    pl.BlockSpec((1, h_pad), lambda i, k: (0, 0)),   # b1 (resident)
                    pl.BlockSpec((h_pad, e_pad), lambda i, k: (0, 0)),  # W2 (resident)
                    pl.BlockSpec((1, e_pad), lambda i, k: (0, 0)),   # b2 (resident)
                ],
                out_specs=pl.BlockSpec((tm, e_pad), lambda i, k: (i, 0)),
                scratch_shapes=[pltpu.VMEM((tm, h_pad), jnp.float32)],
            ),
            compiler_params=pltpu.CompilerParams(
                dimension_semantics=("parallel", "arbitrary"),
                vmem_limit_bytes=budget,
            ),
        )(xp, w1p, b1p, w2p, b2p)

    @jax.jit
    def forward(x1, x2, x3):
        n1, n2, n3 = x1.shape[0], x2.shape[0], x3.shape[0]
        # ONE fused pallas_call over the stacked triplet batch: shared weights
        # are DMA'd to VMEM once (not 3x) and the row-tile count triples.
        xs = jnp.concatenate(
            [x1.reshape(n1, -1), x2.reshape(n2, -1), x3.reshape(n3, -1)],
            axis=0)
        out = _embedding_net(xs)
        return (out[:n1, :embed],
                out[n1:n1 + n2, :embed],
                out[n1 + n2:n1 + n2 + n3, :embed])

    @jax.jit
    def get_embedding(x):
        n = x.shape[0]
        return _embedding_net(x.reshape(n, -1))[:n, :embed]

    return forward, get_embedding


def init_params(key, in_features, hidden, embed):
    """Deterministic synthetic weights (PyTorch-Linear-like scaling)."""
    k1, k2, k3, k4 = jax.random.split(key, 4)
    s1 = 1.0 / jnp.sqrt(in_features)
    s2 = 1.0 / jnp.sqrt(hidden)
    w1 = jax.random.uniform(k1, (in_features, hidden), jnp.float32, -s1, s1)
    b1 = jax.random.uniform(k2, (1, hidden), jnp.float32, -s1, s1)
    w2 = jax.random.uniform(k3, (hidden, embed), jnp.float32, -s2, s2)
    b2 = jax.random.uniform(k4, (1, embed), jnp.float32, -s2, s2)
    return w1, b1, w2, b2


def _reference(x1, x2, x3, params):
    w1, b1, w2, b2 = params

    def emb(x):
        xf = x.reshape(x.shape[0], -1)
        h = jnp.maximum(xf @ w1 + b1, 0.0)
        return h @ w2 + b2

    return emb(x1), emb(x2), emb(x3)


if __name__ == "__main__":
    # Small shapes consistent with the forward: NCHW triplet inputs.
    N, C, H, W = 2, 4, 16, 16
    HIDDEN, EMBED = 128, 32
    D = C * H * W

    key = jax.random.PRNGKey(0)
    kx1, kx2, kx3, kp = jax.random.split(key, 4)
    x1 = jax.random.normal(kx1, (N, C, H, W), jnp.float32)
    x2 = jax.random.normal(kx2, (N, C, H, W), jnp.float32)
    x3 = jax.random.normal(kx3, (N, C, H, W), jnp.float32)
    params = init_params(kp, D, HIDDEN, EMBED)

    forward, _ = make_deep_sort_triplet(params)   # weights prepped once here
    o1, o2, o3 = forward(x1, x2, x3)
    jax.block_until_ready((o1, o2, o3))

    r1, r2, r3 = _reference(x1, x2, x3, params)
    assert o1.shape == (N, EMBED) and o2.shape == (N, EMBED) and o3.shape == (N, EMBED)
    # bf16 matmul inputs with fp32 accumulation -> loosened tolerance.
    assert jnp.allclose(o1, r1, atol=3e-2, rtol=3e-2)
    assert jnp.allclose(o2, r2, atol=3e-2, rtol=3e-2)
    assert jnp.allclose(o3, r3, atol=3e-2, rtol=3e-2)
    print("KERNEL_OK")
</pallas_src>

<mosaic_0001>
module attributes {stable_mosaic.version = 11 : i64} {
  func.func @_embed_kernel(%arg0: i32, %arg1: i32, %arg2: memref<16x1024xbf16, #tpu.memory_space<vmem>>, %arg3: memref<1024x128xbf16, #tpu.memory_space<vmem>>, %arg4: memref<1x128xf32, #tpu.memory_space<vmem>>, %arg5: memref<128x128xbf16, #tpu.memory_space<vmem>>, %arg6: memref<1x128xf32, #tpu.memory_space<vmem>>, %arg7: memref<16x128xf32, #tpu.memory_space<vmem>>, %arg8: memref<16x128xf32, #tpu.memory_space<vmem>>) attributes {dimension_semantics = [#tpu.dimension_semantics<parallel>, #tpu.dimension_semantics<arbitrary>], iteration_bounds = array<i64: 1, 1>, scalar_prefetch = 0 : i64, scratch_operands = 1 : i64, tpu.core_type = #tpu.core_type<tc>, window_params = [{transform_indices = @transform_0, window_bounds = array<i64: 16, 1024>}, {transform_indices = @transform_1, window_bounds = array<i64: 1024, 128>}, {pipeline_mode = #tpu.pipeline_mode<synchronous>, transform_indices = @transform_2, window_bounds = array<i64: 1, 128>}, {pipeline_mode = #tpu.pipeline_mode<synchronous>, transform_indices = @transform_3, window_bounds = array<i64: 128, 128>}, {pipeline_mode = #tpu.pipeline_mode<synchronous>, transform_indices = @transform_4, window_bounds = array<i64: 1, 128>}, {transform_indices = @transform_5, window_bounds = array<i64: 16, 128>}]} {
    %c0_i32 = arith.constant 0 : i32
    %0 = arith.cmpi eq, %arg1, %c0_i32 : i32
    %1 = arith.extui %0 : i1 to i32
    %c0_i32_0 = arith.constant 0 : i32
    %2 = arith.cmpi ne, %1, %c0_i32_0 : i32
    scf.if %2 {
      %cst_10 = arith.constant 0.000000e+00 : f32
      %12 = vector.broadcast %cst_10 : f32 to vector<16x128xf32>
      %c0_11 = arith.constant 0 : index
      %c0_12 = arith.constant 0 : index
      %13 = vector.load %arg8[%c0_11, %c0_12] : memref<16x128xf32, #tpu.memory_space<vmem>>, vector<16x128xf32>
      tpu.vector_store %arg8[%c0_11, %c0_12], %12 {strides = array<i32>} : memref<16x128xf32, #tpu.memory_space<vmem>>, vector<16x128xf32>,
    } else {
    }
    %c0 = arith.constant 0 : index
    %c0_1 = arith.constant 0 : index
    %3 = vector.load %arg8[%c0, %c0_1] : memref<16x128xf32, #tpu.memory_space<vmem>>, vector<16x128xf32>
    %c0_2 = arith.constant 0 : index
    %c0_3 = arith.constant 0 : index
    %4 = vector.load %arg2[%c0_2, %c0_3] : memref<16x1024xbf16, #tpu.memory_space<vmem>>, vector<16x1024xbf16>
    %c0_4 = arith.constant 0 : index
    %c0_5 = arith.constant 0 : index
    %5 = vector.load %arg3[%c0_4, %c0_5] : memref<1024x128xbf16, #tpu.memory_space<vmem>>, vector<1024x128xbf16>
    %cst = arith.constant dense<0.000000e+00> : vector<16x128xf32>
    %6 = tpu.matmul %4, %5, %cst {dimension_numbers = #tpu.dot_dimension_numbers<[1], [0], [0], [1], [0, 0, 1, 1], [], []>} : vector<16x1024xbf16>, vector<1024x128xbf16>, vector<16x128xf32> -> vector<16x128xf32>
    %7 = arith.addf %3, %6 : vector<16x128xf32>
    %c0_6 = arith.constant 0 : index
    %c0_7 = arith.constant 0 : index
    %8 = vector.load %arg8[%c0_6, %c0_7] : memref<16x128xf32, #tpu.memory_space<vmem>>, vector<16x128xf32>
    tpu.vector_store %arg8[%c0_6, %c0_7], %7 {strides = array<i32>} : memref<16x128xf32, #tpu.memory_space<vmem>>, vector<16x128xf32>,
    %c0_i32_8 = arith.constant 0 : i32
    %9 = arith.cmpi eq, %arg1, %c0_i32_8 : i32
    %10 = arith.extui %9 : i1 to i32
    %c0_i32_9 = arith.constant 0 : i32
    %11 = arith.cmpi ne, %10, %c0_i32_9 : i32
    scf.if %11 {
      %c0_10 = arith.constant 0 : index
      %c0_11 = arith.constant 0 : index
      %12 = vector.load %arg8[%c0_10, %c0_11] : memref<16x128xf32, #tpu.memory_space<vmem>>, vector<16x128xf32>
      %c0_12 = arith.constant 0 : index
      %c0_13 = arith.constant 0 : index
      %13 = vector.load %arg4[%c0_12, %c0_13] : memref<1x128xf32, #tpu.memory_space<vmem>>, vector<1x128xf32>
      %14 = vector.broadcast %13 : vector<1x128xf32> to vector<16x128xf32>
      %15 = arith.addf %12, %14 : vector<16x128xf32>
      %cst_14 = arith.constant 0.000000e+00 : f32
      %16 = vector.broadcast %cst_14 : f32 to vector<16x128xf32>
      %17 = arith.maximumf %15, %16 : vector<16x128xf32>
      %18 = arith.truncf %17 : vector<16x128xf32> to vector<16x128xbf16>
      %c0_15 = arith.constant 0 : index
      %c0_16 = arith.constant 0 : index
      %19 = vector.load %arg5[%c0_15, %c0_16] : memref<128x128xbf16, #tpu.memory_space<vmem>>, vector<128x128xbf16>
      %cst_17 = arith.constant dense<0.000000e+00> : vector<16x128xf32>
      %20 = tpu.matmul %18, %19, %cst_17 {dimension_numbers = #tpu.dot_dimension_numbers<[1], [0], [0], [1], [0, 0, 1, 1], [], []>} : vector<16x128xbf16>, vector<128x128xbf16>, vector<16x128xf32> -> vector<16x128xf32>
      %c0_18 = arith.constant 0 : index
      %c0_19 = arith.constant 0 : index
      %21 = vector.load %arg6[%c0_18, %c0_19] : memref<1x128xf32, #tpu.memory_space<vmem>>, vector<1x128xf32>
      %22 = vector.broadcast %21 : vector<1x128xf32> to vector<16x128xf32>
      %23 = arith.addf %20, %22 : vector<16x128xf32>
      %c0_20 = arith.constant 0 : index
      %c0_21 = arith.constant 0 : index
      %24 = vector.load %arg7[%c0_20, %c0_21] : memref<16x128xf32, #tpu.memory_space<vmem>>, vector<16x128xf32>
      tpu.vector_store %arg7[%c0_20, %c0_21], %23 {strides = array<i32>} : memref<16x128xf32, #tpu.memory_space<vmem>>, vector<16x128xf32>,
    } else {
    }
    return
  }
  func.func @transform_0(%arg0: i32, %arg1: i32) -> (i32, i32) {
    %c0_i32 = arith.constant 0 : i32
    return %arg0, %arg1 : i32, i32
  }
  func.func @transform_1(%arg0: i32, %arg1: i32) -> (i32, i32) {
    %c0_i32 = arith.constant 0 : i32
    %c0_i32_0 = arith.constant 0 : i32
    return %arg1, %c0_i32 : i32, i32
  }
  func.func @transform_2(%arg0: i32, %arg1: i32) -> (i32, i32) {
    %c0_i32 = arith.constant 0 : i32
    %c0_i32_0 = arith.constant 0 : i32
    %c0_i32_1 = arith.constant 0 : i32
    return %c0_i32, %c0_i32_0 : i32, i32
  }
  func.func @transform_3(%arg0: i32, %arg1: i32) -> (i32, i32) {
    %c0_i32 = arith.constant 0 : i32
    %c0_i32_0 = arith.constant 0 : i32
    %c0_i32_1 = arith.constant 0 : i32
    return %c0_i32, %c0_i32_0 : i32, i32
  }
  func.func @transform_4(%arg0: i32, %arg1: i32) -> (i32, i32) {
    %c0_i32 = arith.constant 0 : i32
    %c0_i32_0 = arith.constant 0 : i32
    %c0_i32_1 = arith.constant 0 : i32
    return %c0_i32, %c0_i32_0 : i32, i32
  }
  func.func @transform_5(%arg0: i32, %arg1: i32) -> (i32, i32) {
    %c0_i32 = arith.constant 0 : i32
    %c0_i32_0 = arith.constant 0 : i32
    return %arg0, %c0_i32 : i32, i32
  }
}

</mosaic_0001>

<llo_original>
// kernel: forward.1
$region0: #{forward.1}
  #allocation0 [shape = 'u32[]', space=smem, size = 0x4, offset = 0x4, fixed_abs, tag = 'smem constant byte address 0x4 - core index']
  #allocation1 [shape = 'u32[144,128]{1,0:T(1,128)}', space=vmem, size = 0x12000, scoped, tag = 'internal scratch']
  #allocation2 [shape = 'f32[16,128]{1,0:T(8,128)}', space=vmem, size = 0x2000, scoped, tag = 'scratch operand']
  %s0 = inlined_call_operand.vmem [shape: bf16[16,1024], index: 0, kind: input, shape index: {}]
  %s1 = inlined_call_operand.vmem [shape: bf16[1024,128], index: 1, kind: input, shape index: {}]
  %s2 = inlined_call_operand.vmem [shape: f32[1,128], index: 2, kind: input, shape index: {}]
  %s3 = inlined_call_operand.vmem [shape: bf16[128,128], index: 3, kind: input, shape index: {}]
  %s4 = inlined_call_operand.vmem [shape: f32[1,128], index: 4, kind: input, shape index: {}]
  %s5 = inlined_call_operand.vmem [shape: f32[16,128], index: 5, kind: output, shape index: {}]
  %s6 = sld [smem:[#allocation0]]
  $region38: #{forward.1} parent=0
    _
  %s8 = ssub.s32 1, %s6
  %s9 = scalar_select 0, %s8, %s6
  // Predicated region
  $region2: #{forward.1} parent=0 // pred_check
    _
  $region3: #{forward.1} parent=0 // pred_check_branch
    %11 = sbr.rel (0) target = $region5
  $region4: #{forward.1} parent=0 // pred_region
    _
  $region5: #{forward.1} parent=0 // pred_fallthru
    _
  // Predicated region
  $region6: #{forward.1} parent=0 // pred_check
    _
  $region7: #{forward.1} parent=0 // pred_check_branch
    %13 = sbr.rel (0) target = $region9
  $region8: #{forward.1} parent=0 // pred_region
    _
  $region9: #{forward.1} parent=0 // pred_fallthru
    _
  // Predicated region
  $region10: #{forward.1} parent=0 // pred_check
    _
  $region11: #{forward.1} parent=0 // pred_check_branch
    %15 = sbr.rel (0) target = $region13
  $region12: #{forward.1} parent=0 // pred_region
    _
  $region13: #{forward.1} parent=0 // pred_fallthru
    _
  // Predicated region
  $region14: #{forward.1} parent=0 // pred_check
    _
  $region15: #{forward.1} parent=0 // pred_check_branch
    %17 = sbr.rel (0) target = $region17
  $region16: #{forward.1} parent=0 // pred_region
    _
  $region17: #{forward.1} parent=0 // pred_fallthru
    _
  // Predicated region
  $region18: #{forward.1} parent=0 // pred_check
    _
  $region19: #{forward.1} parent=0 // pred_check_branch
    %19 = sbr.rel (0) target = $region21
  $region20: #{forward.1} parent=0 // pred_region
    _
  $region21: #{forward.1} parent=0 // pred_fallthru
    _
  %p21 = scmp.eq.s32.totalorder 0, 0
  // Predicated region
  $region22: #{forward.1} parent=0 // pred_check
    %p22 = pneg %p21
  $region23: #{forward.1} parent=0 // pred_check_branch
    %24 = sbr.rel (%p22) target = $region25
  $region24: #{forward.1} parent=0 // pred_region
    %25 = vst [vmem:[#allocation2] sm:$0xff] 0.0
    %26 = vst [vmem:[#allocation2 + $0x8] sm:$0xff] 0.0
  $region25: #{forward.1} parent=0 // pred_fallthru
    _
  %v27 = vld [vmem:[#allocation2] sm:$0xff]
  %v28 = vld [vmem:[#allocation2 + $0x8] sm:$0xff]
  %v29 = vld [vmem:[%s0] sm:$0xff]
  %v30 = vld [vmem:[%s0 + $0x8] sm:$0xff]
  %v31 = vld [vmem:[%s0 + $0x10] sm:$0xff]
  %v32 = vld [vmem:[%s0 + $0x18] sm:$0xff]
  %v33 = vld [vmem:[%s0 + $0x20] sm:$0xff]
  %v34 = vld [vmem:[%s0 + $0x28] sm:$0xff]
  %v35 = vld [vmem:[%s0 + $0x30] sm:$0xff]
  %v36 = vld [vmem:[%s0 + $0x38] sm:$0xff]
  %v37 = vld [vmem:[%s1] sm:$0xf]
  %v38 = vld [vmem:[%s1 + $0x4] sm:$0xf]
  %v39 = vld [vmem:[%s1 + $0x8] sm:$0xf]
  %v40 = vld [vmem:[%s1 + $0xc] sm:$0xf]
  %v41 = vld [vmem:[%s1 + $0x10] sm:$0xf]
  %v42 = vld [vmem:[%s1 + $0x14] sm:$0xf]
  %v43 = vld [vmem:[%s1 + $0x18] sm:$0xf]
  %v44 = vld [vmem:[%s1 + $0x1c] sm:$0xf]
  %v45 = vld [vmem:[%s1 + $0x20] sm:$0xf]
  %v46 = vld [vmem:[%s1 + $0x24] sm:$0xf]
  %v47 = vld [vmem:[%s1 + $0x28] sm:$0xf]
  %v48 = vld [vmem:[%s1 + $0x2c] sm:$0xf]
  %v49 = vld [vmem:[%s1 + $0x30] sm:$0xf]
  %v50 = vld [vmem:[%s1 + $0x34] sm:$0xf]
  %v51 = vld [vmem:[%s1 + $0x38] sm:$0xf]
  %v52 = vld [vmem:[%s1 + $0x3c] sm:$0xf]
  %v53 = vld [vmem:[%s1 + $0x40] sm:$0xf]
  %v54 = vld [vmem:[%s1 + $0x44] sm:$0xf]
  %v55 = vld [vmem:[%s1 + $0x48] sm:$0xf]
  %v56 = vld [vmem:[%s1 + $0x4c] sm:$0xf]
  %v57 = vld [vmem:[%s1 + $0x50] sm:$0xf]
  %v58 = vld [vmem:[%s1 + $0x54] sm:$0xf]
  %v59 = vld [vmem:[%s1 + $0x58] sm:$0xf]
  %v60 = vld [vmem:[%s1 + $0x5c] sm:$0xf]
  %v61 = vld [vmem:[%s1 + $0x60] sm:$0xf]
  %v62 = vld [vmem:[%s1 + $0x64] sm:$0xf]
  %v63 = vld [vmem:[%s1 + $0x68] sm:$0xf]
  %v64 = vld [vmem:[%s1 + $0x6c] sm:$0xf]
  %v65 = vld [vmem:[%s1 + $0x70] sm:$0xf]
  %v66 = vld [vmem:[%s1 + $0x74] sm:$0xf]
  %v67 = vld [vmem:[%s1 + $0x78] sm:$0xf]
  %v68 = vld [vmem:[%s1 + $0x7c] sm:$0xf]
  %v69 = vld [vmem:[%s1 + $0x80] sm:$0xf]
  %v70 = vld [vmem:[%s1 + $0x84] sm:$0xf]
  %v71 = vld [vmem:[%s1 + $0x88] sm:$0xf]
  %v72 = vld [vmem:[%s1 + $0x8c] sm:$0xf]
  %v73 = vld [vmem:[%s1 + $0x90] sm:$0xf]
  %v74 = vld [vmem:[%s1 + $0x94] sm:$0xf]
  %v75 = vld [vmem:[%s1 + $0x98] sm:$0xf]
  %v76 = vld [vmem:[%s1 + $0x9c] sm:$0xf]
  %v77 = vld [vmem:[%s1 + $0xa0] sm:$0xf]
  %v78 = vld [vmem:[%s1 + $0xa4] sm:$0xf]
  %v79 = vld [vmem:[%s1 + $0xa8] sm:$0xf]
  %v80 = vld [vmem:[%s1 + $0xac] sm:$0xf]
  %v81 = vld [vmem:[%s1 + $0xb0] sm:$0xf]
  %v82 = vld [vmem:[%s1 + $0xb4] sm:$0xf]
  %v83 = vld [vmem:[%s1 + $0xb8] sm:$0xf]
  %v84 = vld [vmem:[%s1 + $0xbc] sm:$0xf]
  %v85 = vld [vmem:[%s1 + $0xc0] sm:$0xf]
  %v86 = vld [vmem:[%s1 + $0xc4] sm:$0xf]
  %v87 = vld [vmem:[%s1 + $0xc8] sm:$0xf]
  %v88 = vld [vmem:[%s1 + $0xcc] sm:$0xf]
  %v89 = vld [vmem:[%s1 + $0xd0] sm:$0xf]
  %v90 = vld [vmem:[%s1 + $0xd4] sm:$0xf]
  %v91 = vld [vmem:[%s1 + $0xd8] sm:$0xf]
  %v92 = vld [vmem:[%s1 + $0xdc] sm:$0xf]
  %v93 = vld [vmem:[%s1 + $0xe0] sm:$0xf]
  %v94 = vld [vmem:[%s1 + $0xe4] sm:$0xf]
  %v95 = vld [vmem:[%s1 + $0xe8] sm:$0xf]
  %v96 = vld [vmem:[%s1 + $0xec] sm:$0xf]
  %v97 = vld [vmem:[%s1 + $0xf0] sm:$0xf]
  %v98 = vld [vmem:[%s1 + $0xf4] sm:$0xf]
  %v99 = vld [vmem:[%s1 + $0xf8] sm:$0xf]
  %v100 = vld [vmem:[%s1 + $0xfc] sm:$0xf]
  %v101 = vld [vmem:[%s1 + $0x100] sm:$0xf]
  %v102 = vld [vmem:[%s1 + $0x104] sm:$0xf]
  %v103 = vld [vmem:[%s1 + $0x108] sm:$0xf]
  %v104 = vld [vmem:[%s1 + $0x10c] sm:$0xf]
  %v105 = vld [vmem:[%s1 + $0x110] sm:$0xf]
  %v106 = vld [vmem:[%s1 + $0x114] sm:$0xf]
  %v107 = vld [vmem:[%s1 + $0x118] sm:$0xf]
  %v108 = vld [vmem:[%s1 + $0x11c] sm:$0xf]
  %v109 = vld [vmem:[%s1 + $0x120] sm:$0xf]
  %v110 = vld [vmem:[%s1 + $0x124] sm:$0xf]
  %v111 = vld [vmem:[%s1 + $0x128] sm:$0xf]
  %v112 = vld [vmem:[%s1 + $0x12c] sm:$0xf]
  %v113 = vld [vmem:[%s1 + $0x130] sm:$0xf]
  %v114 = vld [vmem:[%s1 + $0x134] sm:$0xf]
  %v115 = vld [vmem:[%s1 + $0x138] sm:$0xf]
  %v116 = vld [vmem:[%s1 + $0x13c] sm:$0xf]
  %v117 = vld [vmem:[%s1 + $0x140] sm:$0xf]
  %v118 = vld [vmem:[%s1 + $0x144] sm:$0xf]
  %v119 = vld [vmem:[%s1 + $0x148] sm:$0xf]
  %v120 = vld [vmem:[%s1 + $0x14c] sm:$0xf]
  %v121 = vld [vmem:[%s1 + $0x150] sm:$0xf]
  %v122 = vld [vmem:[%s1 + $0x154] sm:$0xf]
  %v123 = vld [vmem:[%s1 + $0x158] sm:$0xf]
  %v124 = vld [vmem:[%s1 + $0x15c] sm:$0xf]
  %v125 = vld [vmem:[%s1 + $0x160] sm:$0xf]
  %v126 = vld [vmem:[%s1 + $0x164] sm:$0xf]
  %v127 = vld [vmem:[%s1 + $0x168] sm:$0xf]
  %v128 = vld [vmem:[%s1 + $0x16c] sm:$0xf]
  %v129 = vld [vmem:[%s1 + $0x170] sm:$0xf]
  %v130 = vld [vmem:[%s1 + $0x174] sm:$0xf]
  %v131 = vld [vmem:[%s1 + $0x178] sm:$0xf]
  %v132 = vld [vmem:[%s1 + $0x17c] sm:$0xf]
  %v133 = vld [vmem:[%s1 + $0x180] sm:$0xf]
  %v134 = vld [vmem:[%s1 + $0x184] sm:$0xf]
  %v135 = vld [vmem:[%s1 + $0x188] sm:$0xf]
  %v136 = vld [vmem:[%s1 + $0x18c] sm:$0xf]
  %v137 = vld [vmem:[%s1 + $0x190] sm:$0xf]
  %v138 = vld [vmem:[%s1 + $0x194] sm:$0xf]
  %v139 = vld [vmem:[%s1 + $0x198] sm:$0xf]
  %v140 = vld [vmem:[%s1 + $0x19c] sm:$0xf]
  %v141 = vld [vmem:[%s1 + $0x1a0] sm:$0xf]
  %v142 = vld [vmem:[%s1 + $0x1a4] sm:$0xf]
  %v143 = vld [vmem:[%s1 + $0x1a8] sm:$0xf]
  %v144 = vld [vmem:[%s1 + $0x1ac] sm:$0xf]
  %v145 = vld [vmem:[%s1 + $0x1b0] sm:$0xf]
  %v146 = vld [vmem:[%s1 + $0x1b4] sm:$0xf]
  %v147 = vld [vmem:[%s1 + $0x1b8] sm:$0xf]
  %v148 = vld [vmem:[%s1 + $0x1bc] sm:$0xf]
  %v149 = vld [vmem:[%s1 + $0x1c0] sm:$0xf]
  %v150 = vld [vmem:[%s1 + $0x1c4] sm:$0xf]
  %v151 = vld [vmem:[%s1 + $0x1c8] sm:$0xf]
  %v152 = vld [vmem:[%s1 + $0x1cc] sm:$0xf]
  %v153 = vld [vmem:[%s1 + $0x1d0] sm:$0xf]
  %v154 = vld [vmem:[%s1 + $0x1d4] sm:$0xf]
  %v155 = vld [vmem:[%s1 + $0x1d8] sm:$0xf]
  %v156 = vld [vmem:[%s1 + $0x1dc] sm:$0xf]
  %v157 = vld [vmem:[%s1 + $0x1e0] sm:$0xf]
  %v158 = vld [vmem:[%s1 + $0x1e4] sm:$0xf]
  %v159 = vld [vmem:[%s1 + $0x1e8] sm:$0xf]
  %v160 = vld [vmem:[%s1 + $0x1ec] sm:$0xf]
  %v161 = vld [vmem:[%s1 + $0x1f0] sm:$0xf]
  %v162 = vld [vmem:[%s1 + $0x1f4] sm:$0xf]
  %v163 = vld [vmem:[%s1 + $0x1f8] sm:$0xf]
  %v164 = vld [vmem:[%s1 + $0x1fc] sm:$0xf]
  %v173 = vunpack.c.l.b16 %v29
  %v174 = vunpack.c.h.b16 %v29
  %v175 = vunpack.c.l.b16 %v30
  %v176 = vunpack.c.h.b16 %v30
  %v177 = vunpack.c.l.b16 %v31
  %v178 = vunpack.c.h.b16 %v31
  %v179 = vunpack.c.l.b16 %v32
  %v180 = vunpack.c.h.b16 %v32
  %v181 = vunpack.c.l.b16 %v33
  %v182 = vunpack.c.h.b16 %v33
  %v183 = vunpack.c.l.b16 %v34
  %v184 = vunpack.c.h.b16 %v34
  %v185 = vunpack.c.l.b16 %v35
  %v186 = vunpack.c.h.b16 %v35
  %v187 = vunpack.c.l.b16 %v36
  %v188 = vunpack.c.h.b16 %v36
  %v189 = vpack.c.b16 %v181, %v173
  %v190 = vpack.c.b16 %v182, %v174
  %v191 = vpack.c.b16 %v183, %v175
  %v192 = vpack.c.b16 %v184, %v176
  %v193 = vpack.c.b16 %v185, %v177
  %v194 = vpack.c.b16 %v186, %v178
  %v195 = vpack.c.b16 %v187, %v179
  %v196 = vpack.c.b16 %v188, %v180
  %v333 = vunpack.c.l.b16 %v37
  %v334 = vunpack.c.l.b16 %v38
  %v335 = vunpack.c.l.b16 %v39
  %v336 = vunpack.c.l.b16 %v40
  %v337 = vunpack.c.l.b16 %v41
  %v338 = vunpack.c.l.b16 %v42
  %v339 = vunpack.c.l.b16 %v43
  %v340 = vunpack.c.l.b16 %v44
  %v341 = vunpack.c.l.b16 %v45
  %v342 = vunpack.c.l.b16 %v46
  %v343 = vunpack.c.l.b16 %v47
  %v344 = vunpack.c.l.b16 %v48
  %v345 = vunpack.c.l.b16 %v49
  %v346 = vunpack.c.l.b16 %v50
  %v347 = vunpack.c.l.b16 %v51
  %v348 = vunpack.c.l.b16 %v52
  %v349 = vunpack.c.l.b16 %v53
  %v350 = vunpack.c.l.b16 %v54
  %v351 = vunpack.c.l.b16 %v55
  %v352 = vunpack.c.l.b16 %v56
  %v353 = vunpack.c.l.b16 %v57
  %v354 = vunpack.c.l.b16 %v58
  %v355 = vunpack.c.l.b16 %v59
  %v356 = vunpack.c.l.b16 %v60
  %v357 = vunpack.c.l.b16 %v61
  %v358 = vunpack.c.l.b16 %v62
  %v359 = vunpack.c.l.b16 %v63
  %v360 = vunpack.c.l.b16 %v64
  %v361 = vunpack.c.l.b16 %v65
  %v362 = vunpack.c.l.b16 %v66
  %v363 = vunpack.c.l.b16 %v67
  %v364 = vunpack.c.l.b16 %v68
  %v365 = vunpack.c.l.b16 %v69
  %v366 = vunpack.c.l.b16 %v70
  %v367 = vunpack.c.l.b16 %v71
  %v368 = vunpack.c.l.b16 %v72
  %v369 = vunpack.c.l.b16 %v73
  %v370 = vunpack.c.l.b16 %v74
  %v371 = vunpack.c.l.b16 %v75
  %v372 = vunpack.c.l.b16 %v76
  %v373 = vunpack.c.l.b16 %v77
  %v374 = vunpack.c.l.b16 %v78
  %v375 = vunpack.c.l.b16 %v79
  %v376 = vunpack.c.l.b16 %v80
  %v377 = vunpack.c.l.b16 %v81
  %v378 = vunpack.c.l.b16 %v82
  %v379 = vunpack.c.l.b16 %v83
  %v380 = vunpack.c.l.b16 %v84
  %v381 = vunpack.c.l.b16 %v85
  %v382 = vunpack.c.l.b16 %v86
  %v383 = vunpack.c.l.b16 %v87
  %v384 = vunpack.c.l.b16 %v88
  %v385 = vunpack.c.l.b16 %v89
  %v386 = vunpack.c.l.b16 %v90
  %v387 = vunpack.c.l.b16 %v91
  %v388 = vunpack.c.l.b16 %v92
  %v389 = vunpack.c.l.b16 %v93
  %v390 = vunpack.c.l.b16 %v94
  %v391 = vunpack.c.l.b16 %v95
  %v392 = vunpack.c.l.b16 %v96
  %v393 = vunpack.c.l.b16 %v97
  %v394 = vunpack.c.l.b16 %v98
  %v395 = vunpack.c.l.b16 %v99
  %v396 = vunpack.c.l.b16 %v100
  %v397 = vunpack.c.l.b16 %v101
  %v398 = vunpack.c.l.b16 %v102
  %v399 = vunpack.c.l.b16 %v103
  %v400 = vunpack.c.l.b16 %v104
  %v401 = vunpack.c.l.b16 %v105
  %v402 = vunpack.c.l.b16 %v106
  %v403 = vunpack.c.l.b16 %v107
  %v404 = vunpack.c.l.b16 %v108
  %v405 = vunpack.c.l.b16 %v109
  %v406 = vunpack.c.l.b16 %v110
  %v407 = vunpack.c.l.b16 %v111
  %v408 = vunpack.c.l.b16 %v112
  %v409 = vunpack.c.l.b16 %v113
  %v410 = vunpack.c.l.b16 %v114
  %v411 = vunpack.c.l.b16 %v115
  %v412 = vunpack.c.l.b16 %v116
  %v413 = vunpack.c.l.b16 %v117
  %v414 = vunpack.c.l.b16 %v118
  %v415 = vunpack.c.l.b16 %v119
  %v416 = vunpack.c.l.b16 %v120
  %v417 = vunpack.c.l.b16 %v121
  %v418 = vunpack.c.l.b16 %v122
  %v419 = vunpack.c.l.b16 %v123
  %v420 = vunpack.c.l.b16 %v124
  %v421 = vunpack.c.l.b16 %v125
  %v422 = vunpack.c.l.b16 %v126
  %v423 = vunpack.c.l.b16 %v127
  %v424 = vunpack.c.l.b16 %v128
  %v425 = vunpack.c.l.b16 %v129
  %v426 = vunpack.c.l.b16 %v130
  %v427 = vunpack.c.l.b16 %v131
  %v428 = vunpack.c.l.b16 %v132
  %v429 = vunpack.c.l.b16 %v133
  %v430 = vunpack.c.l.b16 %v134
  %v431 = vunpack.c.l.b16 %v135
  %v432 = vunpack.c.l.b16 %v136
  %v433 = vunpack.c.l.b16 %v137
  %v434 = vunpack.c.l.b16 %v138
  %v435 = vunpack.c.l.b16 %v139
  %v436 = vunpack.c.l.b16 %v140
  %v437 = vunpack.c.l.b16 %v141
  %v438 = vunpack.c.l.b16 %v142
  %v439 = vunpack.c.l.b16 %v143
  %v440 = vunpack.c.l.b16 %v144
  %v441 = vunpack.c.l.b16 %v145
  %v442 = vunpack.c.l.b16 %v146
  %v443 = vunpack.c.l.b16 %v147
  %v444 = vunpack.c.l.b16 %v148
  %v445 = vunpack.c.l.b16 %v149
  %v446 = vunpack.c.l.b16 %v150
  %v447 = vunpack.c.l.b16 %v151
  %v448 = vunpack.c.l.b16 %v152
  %v449 = vunpack.c.l.b16 %v153
  %v450 = vunpack.c.l.b16 %v154
  %v451 = vunpack.c.l.b16 %v155
  %v452 = vunpack.c.l.b16 %v156
  %v453 = vunpack.c.l.b16 %v157
  %v454 = vunpack.c.l.b16 %v158
  %v455 = vunpack.c.l.b16 %v159
  %v456 = vunpack.c.l.b16 %v160
  %v457 = vunpack.c.l.b16 %v161
  %v458 = vunpack.c.l.b16 %v162
  %v459 = vunpack.c.l.b16 %v163
  %v460 = vunpack.c.l.b16 %v164
  %v461 = vpack.c.b16 %v334, %v333
  %v462 = vpack.c.b16 %v336, %v335
  %v463 = vpack.c.b16 %v338, %v337
  %v464 = vpack.c.b16 %v340, %v339
  %v465 = vpack.c.b16 %v342, %v341
  %v466 = vpack.c.b16 %v344, %v343
  %v467 = vpack.c.b16 %v346, %v345
  %v468 = vpack.c.b16 %v348, %v347
  %v469 = vpack.c.b16 %v350, %v349
  %v470 = vpack.c.b16 %v352, %v351
  %v471 = vpack.c.b16 %v354, %v353
  %v472 = vpack.c.b16 %v356, %v355
  %v473 = vpack.c.b16 %v358, %v357
  %v474 = vpack.c.b16 %v360, %v359
  %v475 = vpack.c.b16 %v362, %v361
  %v476 = vpack.c.b16 %v364, %v363
  %v477 = vpack.c.b16 %v366, %v365
  %v478 = vpack.c.b16 %v368, %v367
  %v479 = vpack.c.b16 %v370, %v369
  %v480 = vpack.c.b16 %v372, %v371
  %v481 = vpack.c.b16 %v374, %v373
  %v482 = vpack.c.b16 %v376, %v375
  %v483 = vpack.c.b16 %v378, %v377
  %v484 = vpack.c.b16 %v380, %v379
  %v485 = vpack.c.b16 %v382, %v381
  %v486 = vpack.c.b16 %v384, %v383
  %v487 = vpack.c.b16 %v386, %v385
  %v488 = vpack.c.b16 %v388, %v387
  %v489 = vpack.c.b16 %v390, %v389
  %v490 = vpack.c.b16 %v392, %v391
  %v491 = vpack.c.b16 %v394, %v393
  %v492 = vpack.c.b16 %v396, %v395
  %v493 = vpack.c.b16 %v398, %v397
  %v494 = vpack.c.b16 %v400, %v399
  %v495 = vpack.c.b16 %v402, %v401
  %v496 = vpack.c.b16 %v404, %v403
  %v497 = vpack.c.b16 %v406, %v405
  %v498 = vpack.c.b16 %v408, %v407
  %v499 = vpack.c.b16 %v410, %v409
  %v500 = vpack.c.b16 %v412, %v411
  %v501 = vpack.c.b16 %v414, %v413
  %v502 = vpack.c.b16 %v416, %v415
  %v503 = vpack.c.b16 %v418, %v417
  %v504 = vpack.c.b16 %v420, %v419
  %v505 = vpack.c.b16 %v422, %v421
  %v506 = vpack.c.b16 %v424, %v423
  %v507 = vpack.c.b16 %v426, %v425
  %v508 = vpack.c.b16 %v428, %v427
  %v509 = vpack.c.b16 %v430, %v429
  %v510 = vpack.c.b16 %v432, %v431
  %v511 = vpack.c.b16 %v434, %v433
  %v512 = vpack.c.b16 %v436, %v435
  %v513 = vpack.c.b16 %v438, %v437
  %v514 = vpack.c.b16 %v440, %v439
  %v515 = vpack.c.b16 %v442, %v441
  %v516 = vpack.c.b16 %v444, %v443
  %v517 = vpack.c.b16 %v446, %v445
  %v518 = vpack.c.b16 %v448, %v447
  %v519 = vpack.c.b16 %v450, %v449
  %v520 = vpack.c.b16 %v452, %v451
  %v521 = vpack.c.b16 %v454, %v453
  %v522 = vpack.c.b16 %v456, %v455
  %v523 = vpack.c.b16 %v458, %v457
  %v524 = vpack.c.b16 %v460, %v459
  %589 = vmatprep.subr.bf16.mxu0 0
  %590 = vmatpush1.bf16.msra.mxu0 %v468
  %591 = vmatprep.subr.bf16.mxu0 0
  %592 = vmatpush1.bf16.msra.mxu0 %v467
  %593 = vmatprep.subr.bf16.mxu0 0
  %594 = vmatpush1.bf16.msra.mxu0 %v466
  %595 = vmatprep.subr.bf16.mxu0 0
  %596 = vmatpush1.bf16.msra.mxu0 %v465
  %597 = vmatprep.subr.bf16.mxu0 0
  %598 = vmatpush1.bf16.msra.mxu0 %v464
  %599 = vmatprep.subr.bf16.mxu0 0
  %600 = vmatpush1.bf16.msra.mxu0 %v463
  %601 = vmatprep.subr.bf16.mxu0 0
  %602 = vmatpush1.bf16.msra.mxu0 %v462
  %603 = vmatprep.subr.bf16.mxu0 0
  %604 = vmatpush1.bf16.msra.mxu0 %v461
  %605 = vmatprep.subr.bf16.mxu0 0
  %606 = vmatpush2.bf16.msra.mxu0 %v476
  %607 = vmatprep.subr.bf16.mxu0 0
  %608 = vmatpush2.bf16.msra.mxu0 %v475
  %609 = vmatprep.subr.bf16.mxu0 0
  %610 = vmatpush2.bf16.msra.mxu0 %v474
  %611 = vmatprep.subr.bf16.mxu0 0
  %612 = vmatpush2.bf16.msra.mxu0 %v473
  %613 = vmatprep.subr.bf16.mxu0 0
  %614 = vmatpush2.bf16.msra.mxu0 %v472
  %615 = vmatprep.subr.bf16.mxu0 0
  %616 = vmatpush2.bf16.msra.mxu0 %v471
  %617 = vmatprep.subr.bf16.mxu0 0
  %618 = vmatpush2.bf16.msra.mxu0 %v470
  %619 = vmatprep.subr.bf16.mxu0 0
  %620 = vmatpush2.bf16.msra.mxu0 %v469
  %621 = vmatprep.mubr.bf16.mxu0 %v190
  %622 = vmatmul.mubr.bf16.gmra.mxu0 %v189
  %v623 = vpop.f32.mrf.mxu0
  %v624 = vadd.f32 0.0, %v623
  %v625 = vpop.f32.mrf.mxu0
  %v626 = vpop.f32.mrf.mxu0
  %v627 = vadd.f32 0.0, %v626
  %v628 = vpop.f32.mrf.mxu0
  %629 = vdwg.mxu0
  %630 = vmatprep.subr.bf16.mxu0 0
  %631 = vmatpush1.bf16.msra.mxu0 %v484
  %632 = vmatprep.subr.bf16.mxu0 0
  %633 = vmatpush1.bf16.msra.mxu0 %v483
  %634 = vmatprep.subr.bf16.mxu0 0
  %635 = vmatpush1.bf16.msra.mxu0 %v482
  %636 = vmatprep.subr.bf16.mxu0 0
  %637 = vmatpush1.bf16.msra.mxu0 %v481
  %638 = vmatprep.subr.bf16.mxu0 0
  %639 = vmatpush1.bf16.msra.mxu0 %v480
  %640 = vmatprep.subr.bf16.mxu0 0
  %641 = vmatpush1.bf16.msra.mxu0 %v479
  %642 = vmatprep.subr.bf16.mxu0 0
  %643 = vmatpush1.bf16.msra.mxu0 %v478
  %644 = vmatprep.subr.bf16.mxu0 0
  %645 = vmatpush1.bf16.msra.mxu0 %v477
  %646 = vmatprep.subr.bf16.mxu0 0
  %647 = vmatpush2.bf16.msra.mxu0 %v492
  %648 = vmatprep.subr.bf16.mxu0 0
  %649 = vmatpush2.bf16.msra.mxu0 %v491
  %650 = vmatprep.subr.bf16.mxu0 0
  %651 = vmatpush2.bf16.msra.mxu0 %v490
  %652 = vmatprep.subr.bf16.mxu0 0
  %653 = vmatpush2.bf16.msra.mxu0 %v489
  %654 = vmatprep.subr.bf16.mxu0 0
  %655 = vmatpush2.bf16.msra.mxu0 %v488
  %656 = vmatprep.subr.bf16.mxu0 0
  %657 = vmatpush2.bf16.msra.mxu0 %v487
  %658 = vmatprep.subr.bf16.mxu0 0
  %659 = vmatpush2.bf16.msra.mxu0 %v486
  %660 = vmatprep.subr.bf16.mxu0 0
  %661 = vmatpush2.bf16.msra.mxu0 %v485
  %662 = vmatprep.mubr.bf16.mxu0 %v192
  %663 = vmatmul.mubr.bf16.gmra.mxu0 %v191
  %v664 = vpop.f32.mrf.mxu0
  %v665 = vadd.f32 %v624, %v664
  %v666 = vpop.f32.mrf.mxu0
  %v667 = vpop.f32.mrf.mxu0
  %v668 = vadd.f32 %v627, %v667
  %v669 = vpop.f32.mrf.mxu0
  %670 = vdwg.mxu0
  %671 = vmatprep.subr.bf16.mxu0 0
  %672 = vmatpush1.bf16.msra.mxu0 %v500
  %673 = vmatprep.subr.bf16.mxu0 0
  %674 = vmatpush1.bf16.msra.mxu0 %v499
  %675 = vmatprep.subr.bf16.mxu0 0
  %676 = vmatpush1.bf16.msra.mxu0 %v498
  %677 = vmatprep.subr.bf16.mxu0 0
  %678 = vmatpush1.bf16.msra.mxu0 %v497
  %679 = vmatprep.subr.bf16.mxu0 0
  %680 = vmatpush1.bf16.msra.mxu0 %v496
  %681 = vmatprep.subr.bf16.mxu0 0
  %682 = vmatpush1.bf16.msra.mxu0 %v495
  %683 = vmatprep.subr.bf16.mxu0 0
  %684 = vmatpush1.bf16.msra.mxu0 %v494
  %685 = vmatprep.subr.bf16.mxu0 0
  %686 = vmatpush1.bf16.msra.mxu0 %v493
  %687 = vmatprep.subr.bf16.mxu0 0
  %688 = vmatpush2.bf16.msra.mxu0 %v508
  %689 = vmatprep.subr.bf16.mxu0 0
  %690 = vmatpush2.bf16.msra.mxu0 %v507
  %691 = vmatprep.subr.bf16.mxu0 0
  %692 = vmatpush2.bf16.msra.mxu0 %v506
  %693 = vmatprep.subr.bf16.mxu0 0
  %694 = vmatpush2.bf16.msra.mxu0 %v505
  %695 = vmatprep.subr.bf16.mxu0 0
  %696 = vmatpush2.bf16.msra.mxu0 %v504
  %697 = vmatprep.subr.bf16.mxu0 0
  %698 = vmatpush2.bf16.msra.mxu0 %v503
  %699 = vmatprep.subr.bf16.mxu0 0
  %700 = vmatpush2.bf16.msra.mxu0 %v502
  %701 = vmatprep.subr.bf16.mxu0 0
  %702 = vmatpush2.bf16.msra.mxu0 %v501
  %703 = vmatprep.mubr.bf16.mxu0 %v194
  %704 = vmatmul.mubr.bf16.gmra.mxu0 %v193
  %v705 = vpop.f32.mrf.mxu0
  %v706 = vadd.f32 %v665, %v705
  %v707 = vpop.f32.mrf.mxu0
  %v708 = vpop.f32.mrf.mxu0
  %v709 = vadd.f32 %v668, %v708
  %v710 = vpop.f32.mrf.mxu0
  %711 = vdwg.mxu0
  %712 = vmatprep.subr.bf16.mxu0 0
  %713 = vmatpush1.bf16.msra.mxu0 %v516
  %714 = vmatprep.subr.bf16.mxu0 0
  %715 = vmatpush1.bf16.msra.mxu0 %v515
  %716 = vmatprep.subr.bf16.mxu0 0
  %717 = vmatpush1.bf16.msra.mxu0 %v514
  %718 = vmatprep.subr.bf16.mxu0 0
  %719 = vmatpush1.bf16.msra.mxu0 %v513
  %720 = vmatprep.subr.bf16.mxu0 0
  %721 = vmatpush1.bf16.msra.mxu0 %v512
  %722 = vmatprep.subr.bf16.mxu0 0
  %723 = vmatpush1.bf16.msra.mxu0 %v511
  %724 = vmatprep.subr.bf16.mxu0 0
  %725 = vmatpush1.bf16.msra.mxu0 %v510
  %726 = vmatprep.subr.bf16.mxu0 0
  %727 = vmatpush1.bf16.msra.mxu0 %v509
  %728 = vmatprep.subr.bf16.mxu0 0
  %729 = vmatpush2.bf16.msra.mxu0 %v524
  %730 = vmatprep.subr.bf16.mxu0 0
  %731 = vmatpush2.bf16.msra.mxu0 %v523
  %732 = vmatprep.subr.bf16.mxu0 0
  %733 = vmatpush2.bf16.msra.mxu0 %v522
  %734 = vmatprep.subr.bf16.mxu0 0
  %735 = vmatpush2.bf16.msra.mxu0 %v521
  %736 = vmatprep.subr.bf16.mxu0 0
  %737 = vmatpush2.bf16.msra.mxu0 %v520
  %738 = vmatprep.subr.bf16.mxu0 0
  %739 = vmatpush2.bf16.msra.mxu0 %v519
  %740 = vmatprep.subr.bf16.mxu0 0
  %741 = vmatpush2.bf16.msra.mxu0 %v518
  %742 = vmatprep.subr.bf16.mxu0 0
  %743 = vmatpush2.bf16.msra.mxu0 %v517
  %744 = vmatprep.mubr.bf16.mxu0 %v196
  %745 = vmatmul.mubr.bf16.gmra.mxu0 %v195
  %v746 = vpop.f32.mrf.mxu0
  %v747 = vadd.f32 %v706, %v746
  %v748 = vpop.f32.mrf.mxu0
  %v749 = vpop.f32.mrf.mxu0
  %v750 = vadd.f32 %v709, %v749
  %v751 = vpop.f32.mrf.mxu0
  %752 = vdwg.mxu0
  %v753 = vadd.f32 %v27, %v747
  %v754 = vadd.f32 %v28, %v750
  %755 = vst [vmem:[#allocation2] sm:$0xff] %v753
  %756 = vst [vmem:[#allocation2 + $0x8] sm:$0xff] %v754
  // Predicated region
  $region26: #{forward.1} parent=0 // pred_check
    %p757 = pneg %p21
  $region27: #{forward.1} parent=0 // pred_check_branch
    %759 = sbr.rel (%p757) target = $region29
  $region28: #{forward.1} parent=0 // pred_region
    %v760 = vld [vmem:[#allocation2] sm:$0xff]
    %v761 = vld [vmem:[#allocation2 + $0x8] sm:$0xff]
    %v762 = vld [vmem:[%s2] sm:$0x1]
    %v764 = vlaneseq
    %v765 = vshrl.u32 %v764, 7
    %v766 = vsub.s32 0, %v765
    %v767 = vrot.slane %v762, %v766
    %v769 = vadd.f32 %v760, %v767
    %v770 = vadd.f32 %v761, %v767
    %v771 = vmax.f32 %v769, 0.0
    %v772 = vmax.f32 %v770, 0.0
    %v773 = vpack.c.bf16 %v772, %v771
    %v774 = vld [vmem:[%s3] sm:$0xf]
    %v775 = vld [vmem:[%s3 + $0x4] sm:$0xf]
    %v776 = vld [vmem:[%s3 + $0x8] sm:$0xf]
    %v777 = vld [vmem:[%s3 + $0xc] sm:$0xf]
    %v778 = vld [vmem:[%s3 + $0x10] sm:$0xf]
    %v779 = vld [vmem:[%s3 + $0x14] sm:$0xf]
    %v780 = vld [vmem:[%s3 + $0x18] sm:$0xf]
    %v781 = vld [vmem:[%s3 + $0x1c] sm:$0xf]
    %v782 = vld [vmem:[%s3 + $0x20] sm:$0xf]
    %v783 = vld [vmem:[%s3 + $0x24] sm:$0xf]
    %v784 = vld [vmem:[%s3 + $0x28] sm:$0xf]
    %v785 = vld [vmem:[%s3 + $0x2c] sm:$0xf]
    %v786 = vld [vmem:[%s3 + $0x30] sm:$0xf]
    %v787 = vld [vmem:[%s3 + $0x34] sm:$0xf]
    %v788 = vld [vmem:[%s3 + $0x38] sm:$0xf]
    %v789 = vld [vmem:[%s3 + $0x3c] sm:$0xf]
    %v790 = vld [vmem:[%s4] sm:$0x1]
    %v792 = vlaneseq
    %v793 = vshrl.u32 %v792, 7
    %v794 = vsub.s32 0, %v793
    %v795 = vrot.slane %v790, %v794
    %v813 = vunpack.c.l.b16 %v774
    %v814 = vunpack.c.l.b16 %v775
    %v815 = vunpack.c.l.b16 %v776
    %v816 = vunpack.c.l.b16 %v777
    %v817 = vunpack.c.l.b16 %v778
    %v818 = vunpack.c.l.b16 %v779
    %v819 = vunpack.c.l.b16 %v780
    %v820 = vunpack.c.l.b16 %v781
    %v821 = vunpack.c.l.b16 %v782
    %v822 = vunpack.c.l.b16 %v783
    %v823 = vunpack.c.l.b16 %v784
    %v824 = vunpack.c.l.b16 %v785
    %v825 = vunpack.c.l.b16 %v786
    %v826 = vunpack.c.l.b16 %v787
    %v827 = vunpack.c.l.b16 %v788
    %v828 = vunpack.c.l.b16 %v789
    %v829 = vpack.c.b16 %v814, %v813
    %v830 = vpack.c.b16 %v816, %v815
    %v831 = vpack.c.b16 %v818, %v817
    %v832 = vpack.c.b16 %v820, %v819
    %v833 = vpack.c.b16 %v822, %v821
    %v834 = vpack.c.b16 %v824, %v823
    %v835 = vpack.c.b16 %v826, %v825
    %v836 = vpack.c.b16 %v828, %v827
    %845 = vmatprep.subr.bf16.mxu0 0
    %846 = vmatpush1.bf16.msra.mxu0 %v836
    %847 = vmatprep.subr.bf16.mxu0 0
    %848 = vmatpush1.bf16.msra.mxu0 %v835
    %849 = vmatprep.subr.bf16.mxu0 0
    %850 = vmatpush1.bf16.msra.mxu0 %v834
    %851 = vmatprep.subr.bf16.mxu0 0
    %852 = vmatpush1.bf16.msra.mxu0 %v833
    %853 = vmatprep.subr.bf16.mxu0 0
    %854 = vmatpush1.bf16.msra.mxu0 %v832
    %855 = vmatprep.subr.bf16.mxu0 0
    %856 = vmatpush1.bf16.msra.mxu0 %v831
    %857 = vmatprep.subr.bf16.mxu0 0
    %858 = vmatpush1.bf16.msra.mxu0 %v830
    %859 = vmatprep.subr.bf16.mxu0 0
    %860 = vmatpush1.bf16.msra.mxu0 %v829
    %861 = vmatprep.subr.bf16.mxu0 0
    %862 = vmatpush2.bf16.msra.mxu0 0
    %863 = vmatprep.subr.bf16.mxu0 0
    %864 = vmatpush2.bf16.msra.mxu0 0
    %865 = vmatprep.subr.bf16.mxu0 0
    %866 = vmatpush2.bf16.msra.mxu0 0
    %867 = vmatprep.subr.bf16.mxu0 0
    %868 = vmatpush2.bf16.msra.mxu0 0
    %869 = vmatprep.subr.bf16.mxu0 0
    %870 = vmatpush2.bf16.msra.mxu0 0
    %871 = vmatprep.subr.bf16.mxu0 0
    %872 = vmatpush2.bf16.msra.mxu0 0
    %873 = vmatprep.subr.bf16.mxu0 0
    %874 = vmatpush2.bf16.msra.mxu0 0
    %875 = vmatprep.subr.bf16.mxu0 0
    %876 = vmatpush2.bf16.msra.mxu0 0
    %877 = vmatprep.mubr.bf16.mxu0 0
    %878 = vmatmul.mubr.bf16.gmra.mxu0 %v773
    %v879 = vpop.f32.mrf.mxu0
    %v880 = vadd.f32 %v795, %v879
    %v881 = vpop.f32.mrf.mxu0
    %v882 = vpop.f32.mrf.mxu0
    %v883 = vadd.f32 %v795, %v882
    %v884 = vpop.f32.mrf.mxu0
    %885 = vdwg.mxu0
    %886 = vst [vmem:[%s5] sm:$0xff] %v880
    %887 = vst [vmem:[%s5 + $0x8] sm:$0xff] %v883
  $region29: #{forward.1} parent=0 // pred_fallthru
    _
  // Predicated region
  $region30: #{forward.1} parent=0 // pred_check
    _
  $region31: #{forward.1} parent=0 // pred_check_branch
    %889 = sbr.rel (0) target = $region33
  $region32: #{forward.1} parent=0 // pred_region
    _
  $region33: #{forward.1} parent=0 // pred_fallthru
    _
  // Predicated region
  $region34: #{forward.1} parent=0 // pred_check
    _
  $region35: #{forward.1} parent=0 // pred_check_branch
    %891 = sbr.rel (0) target = $region37
  $region36: #{forward.1} parent=0 // pred_region
    _
  $region37: #{forward.1} parent=0 // pred_fallthru
    _

</llo_original>
